<compile_context>
chip_gen: v7x
topology: tpu7x:2x2x1
jax: 0.10.0
libtpu: 0.0.40
codegen_flags: <defaults>
</compile_context>

<pallas_src>
import math
from collections.abc import Sequence
from functools import partial

import jax
import jax.numpy as jnp
from jax.experimental import pallas as pl
from jax.experimental.pallas import tpu as pltpu


# --------------------------------------------------------------------------
# Pallas kernel: fused per-pixel GRU cell + 1x1 output head.
# Layout: channels on sublanes, pixels on lanes.
#   x_ref      [C_in,    tile_n]  f32   input pixels
#   h_ref      [C_hid,   tile_n]  f32   recurrent state
#   wih_ref    [3*C_hid, C_in ]   bf16  torch GRUCell weight_ih (rows r|z|n)
#   whh_ref    [3*C_hid, C_hid]   bf16  torch GRUCell weight_hh (rows r|z|n)
#   bx_ref     [3*C_hid, 1]       f32   b_ih with b_hr/b_hz folded in
#   bhn_ref    [C_hid,   1]       f32   b_hn kept separate (reset-gate semantics)
#   wo_ref     [8k,      C_hid]   bf16  1x1 head weight, rows padded to mult. of 8
#   bo_ref     [C_out,   1]       f32   1x1 head bias
#   y_ref      [C_out,   tile_n]  f32
#   h_new_ref  [C_hid,   tile_n]  f32   (aliases the h input buffer in HBM)
# --------------------------------------------------------------------------
def gru_head_kernel(x_ref, h_ref, wih_ref, whh_ref, bx_ref, bhn_ref,
                    wo_ref, bo_ref, y_ref, h_new_ref):
    c = h_ref.shape[0]            # C_hid
    c_out = y_ref.shape[0]        # real output channels

    h = h_ref[...]                                   # f32 state (kept f32)
    x_bf = x_ref[...].astype(jnp.bfloat16)           # in-register cast for MXU
    h_bf = h.astype(jnp.bfloat16)

    # Gate pre-activations, rows [ r | z | n ], lane-dense [3*C_hid, tile_n].
    #   r = sigmoid(W_ir x + b_ir + W_hr h + b_hr)
    #   z = sigmoid(W_iz x + b_iz + W_hz h + b_hz)
    #   n = tanh  (W_in x + b_in + r * (W_hn h + b_hn))
    gx = jnp.dot(wih_ref[...], x_bf, preferred_element_type=jnp.float32) + bx_ref[...]
    gh = jnp.dot(whh_ref[...], h_bf, preferred_element_type=jnp.float32)

    rz = jax.nn.sigmoid(gx[:2 * c, :] + gh[:2 * c, :])
    r, z = rz[:c, :], rz[c:, :]
    n = jnp.tanh(gx[2 * c:, :] + r * (gh[2 * c:, :] + bhn_ref[...]))
    h_new = (1.0 - z) * n + z * h                    # exact torch.nn.GRUCell update
    h_new_ref[...] = h_new.astype(h_new_ref.dtype)

    # 1x1 output head: dense [C_out, tile_n] store (no 128-lane zero padding).
    y = jnp.dot(wo_ref[...], h_new.astype(jnp.bfloat16),
                preferred_element_type=jnp.float32)[:c_out, :] + bo_ref[...]
    y_ref[...] = y.astype(y_ref.dtype)


def _pick_tile_n(n_pixels, batch, *, max_tile=4096, min_tile=128, min_steps=4):
    """Pixel-axis tile: power-of-two multiple of 128 lanes, capped so the
    double-buffered working set stays far under scoped VMEM, shrunk until the
    2-D grid (batch x pixel-tiles) has >= min_steps total steps so both v7x
    TensorCores get work and each core keeps >= 2 steps for DMA overlap."""
    padded = -(-n_pixels // min_tile) * min_tile
    tile = max_tile
    while tile > min_tile and (tile > padded
                               or batch * (-(-padded // tile)) < min_steps):
        tile //= 2
    return tile


def _gru_cell_call(params, x_pad, h_pad, tile_n):
    """x_pad [B, C_in, Np] f32, h_pad [B, C_hid, Np] f32 ->
       (y [B, C_out, Np] f32, h_new [B, C_hid, Np] f32)."""
    b, c_in, n_p = x_pad.shape
    c_hid = h_pad.shape[1]
    c_out = params["b_out"].shape[0]

    tile_spec = lambda c: pl.BlockSpec((None, c, tile_n), lambda bi, ni: (bi, 0, ni))
    full_spec = lambda r, c: pl.BlockSpec((r, c), lambda bi, ni: (0, 0))

    return pl.pallas_call(
        gru_head_kernel,
        out_shape=[
            jax.ShapeDtypeStruct((b, c_out, n_p), jnp.float32),
            jax.ShapeDtypeStruct((b, c_hid, n_p), jnp.float32),
        ],
        grid_spec=pltpu.PrefetchScalarGridSpec(
            num_scalar_prefetch=0,
            grid=(b, n_p // tile_n),
            in_specs=[
                tile_spec(c_in),                              # x
                tile_spec(c_hid),                             # h
                full_spec(3 * c_hid, c_in),                   # weight_ih
                full_spec(3 * c_hid, c_hid),                  # weight_hh
                full_spec(3 * c_hid, 1),                      # gate bias (x side)
                full_spec(c_hid, 1),                          # b_hn
                full_spec(params["w_out"].shape[0], c_hid),   # head weight (8-row pad)
                full_spec(c_out, 1),                          # head bias
            ],
            out_specs=[tile_spec(c_out), tile_spec(c_hid)],
        ),
        # Recurrent state buffer is reused in place for h_new.
        input_output_aliases={1: 1},
        compiler_params=pltpu.CompilerParams(
            dimension_semantics=("parallel", "parallel"),
        ),
    )(x_pad, h_pad,
      params["w_ih"], params["w_hh"], params["b_x"], params["b_hn"],
      params["w_out"], params["b_out"])


@partial(jax.jit, static_argnames=("tile_n", "n_pad"), donate_argnames=("h",))
def gru_step(params, x_nchw, h, *, tile_n, n_pad):
    """One recurrent step: NCHW input + padded [B, C_hid, Np] state ->
       (NCHW output, new padded state).  The state argument is donated so the
       pallas-level alias can update it in place."""
    b, c_in, hh, ww = x_nchw.shape
    p = hh * ww
    c_out = params["b_out"].shape[0]

    x = x_nchw.reshape(b, c_in, p)            # NCHW is already channels x pixels
    if n_pad != p:
        x = jnp.pad(x, ((0, 0), (0, 0), (0, n_pad - p)))

    y_pad, h_new = _gru_cell_call(params, x, h, tile_n)
    y = y_pad[:, :, :p].reshape(b, c_out, hh, ww)
    return y, h_new


# --------------------------------------------------------------------------
# recursive_detach analogue (JAX arrays are immutable -> return detached tree)
# --------------------------------------------------------------------------
def recursive_detach(x):
    if isinstance(x, jax.Array):
        return jax.lax.stop_gradient(x)
    elif isinstance(x, Sequence):
        return type(x)(recursive_detach(xx) for xx in x)
    elif x is None:
        return None
    else:
        raise TypeError(f"expected jax.Array or Sequence, got {type(x)}")


# --------------------------------------------------------------------------
# NetworkWrapper: stateful recurrent wrapper around the Pallas base forward.
# --------------------------------------------------------------------------
class NetworkWrapper:
    def __init__(self, params, hidden_channels, out_channels):
        self.params = params
        self.hidden_channels = hidden_channels
        self.out_channels = out_channels
        self._layout = None          # (B, H, W, tile_n, n_pad)
        self.reset_state()

    # --- base network forward: (NCHW input, state|None) -> (NCHW x, state)
    def _base_forward(self, input, hidden):
        b, _, h, w = input.shape
        p = h * w
        if self._layout is None or self._layout[:3] != (b, h, w):
            tile_n = _pick_tile_n(p, b)
            n_pad = -(-p // tile_n) * tile_n
            self._layout = (b, h, w, tile_n, n_pad)
        _, _, _, tile_n, n_pad = self._layout
        if hidden is None:
            # state is stored persistently padded; padded-tail pixels evolve
            # independently (per-pixel GRU) and are never read back.
            hidden = jnp.zeros((b, self.hidden_channels, n_pad), jnp.float32)
        x, hidden = gru_step(self.params, input, hidden, tile_n=tile_n, n_pad=n_pad)
        return x, hidden

    # --- wrapper forward (mirrors the PyTorch module exactly)
    def __call__(self, input):
        hidden = self.get_state()
        x, hidden = self._base_forward(input, hidden)
        self.set_state(hidden)
        return x

    def reset(self):
        self.reset_state()

    def detach(self):
        self.detach_state()

    def reset_state(self):
        self.state = None

    def detach_state(self):
        self.state = recursive_detach(self.state)

    def get_state(self):
        return self.state

    def set_state(self, state):
        self.state = state

    def get_state_nchw(self):
        """NCHW view of the hidden state for external consumers."""
        if self.state is None:
            return None
        b, h, w, _, _ = self._layout
        return self.state[:, :, :h * w].reshape(b, self.hidden_channels, h, w)

    # TODO(synk): `trace()` (TensorRT/torch.jit export path) has no Pallas
    # equivalent; jax.jit of the forward covers its intent.


# --------------------------------------------------------------------------
# Deterministic parameter construction (GRUCell-style uniform init), packed
# into the channels-on-sublanes layout the kernel expects (== torch's native
# [3*Chid, Cin]/[3*Chid, Chid] row layout, rows r|z|n).  Weights bf16,
# biases f32.
# --------------------------------------------------------------------------
def make_params(key, c_in, c_hid, c_out):
    bound = 1.0 / math.sqrt(c_hid)
    keys = jax.random.split(key, 6)
    u = lambda k, shape: jax.random.uniform(
        k, shape, dtype=jnp.float32, minval=-bound, maxval=bound)

    w_ih = u(keys[0], (3 * c_hid, c_in))     # rows [r|z|n]  == torch weight_ih
    w_hh = u(keys[1], (3 * c_hid, c_hid))    # rows [r|z|n]  == torch weight_hh
    b_ih = u(keys[2], (3 * c_hid, 1))
    b_hh = u(keys[3], (3 * c_hid, 1))
    w_out = u(keys[4], (c_out, c_hid))
    b_out = u(keys[5], (c_out, 1))

    # b_hr/b_hz fold into the x-side bias; b_hn stays separate so the reset
    # gate semantics n = tanh(i_n + b_in + r*(h_n + b_hn)) are exact.
    b_x = b_ih.at[:2 * c_hid].add(b_hh[:2 * c_hid])
    b_hn = b_hh[2 * c_hid:]

    # head weight rows padded to a multiple of 8 sublanes for the MXU; only
    # the first c_out rows of the result are computed into / stored from y.
    c_out_pad = -(-c_out // 8) * 8
    w_out_p = jnp.zeros((c_out_pad, c_hid), jnp.float32).at[:c_out].set(w_out)

    return {
        "w_ih": w_ih.astype(jnp.bfloat16),
        "w_hh": w_hh.astype(jnp.bfloat16),
        "b_x": b_x,
        "b_hn": b_hn,
        "w_out": w_out_p.astype(jnp.bfloat16),
        "b_out": b_out,
    }


# --------------------------------------------------------------------------
# Pure-JAX reference of one fused GRU+head step (same bf16 casts and f32
# accumulation as the kernel) for the correctness cross-check.
# --------------------------------------------------------------------------
def reference_step(params, x_nchw, h_pad):
    b, c_in, hh, ww = x_nchw.shape
    p = hh * ww
    c = h_pad.shape[1]
    n_pad = h_pad.shape[2]
    c_out = params["b_out"].shape[0]

    x = x_nchw.reshape(b, c_in, p)
    if n_pad != p:
        x = jnp.pad(x, ((0, 0), (0, 0), (0, n_pad - p)))

    gx = jnp.einsum("gc,bcn->bgn", params["w_ih"], x.astype(jnp.bfloat16),
                    preferred_element_type=jnp.float32) + params["b_x"]
    gh = jnp.einsum("gc,bcn->bgn", params["w_hh"], h_pad.astype(jnp.bfloat16),
                    preferred_element_type=jnp.float32)
    r = jax.nn.sigmoid(gx[:, :c] + gh[:, :c])
    z = jax.nn.sigmoid(gx[:, c:2 * c] + gh[:, c:2 * c])
    n = jnp.tanh(gx[:, 2 * c:] + r * (gh[:, 2 * c:] + params["b_hn"]))
    h_new = (1.0 - z) * n + z * h_pad
    y = jnp.einsum("oc,bcn->bon", params["w_out"][:c_out],
                   h_new.astype(jnp.bfloat16),
                   preferred_element_type=jnp.float32) + params["b_out"]
    y = y[:, :, :p].reshape(b, c_out, hh, ww)
    return y, h_new


if __name__ == "__main__":
    B, C_IN, H, W = 2, 4, 16, 16
    C_HID, C_OUT = 32, 2

    key = jax.random.PRNGKey(0)
    k_params, k_x1, k_x2, k_h = jax.random.split(key, 4)

    params = make_params(k_params, C_IN, C_HID, C_OUT)
    net = NetworkWrapper(params, hidden_channels=C_HID, out_channels=C_OUT)

    x1 = jax.random.normal(k_x1, (B, C_IN, H, W), dtype=jnp.float32)
    x2 = jax.random.normal(k_x2, (B, C_IN, H, W), dtype=jnp.float32)

    y1 = net(x1)                 # step 1: state is None -> zero hidden
    net.detach()                 # mirrors training-loop detach between steps
    y2 = net(x2)                 # step 2: uses hidden carried by the wrapper

    y1 = jax.block_until_ready(y1)
    y2 = jax.block_until_ready(y2)

    assert y1.shape == (B, C_OUT, H, W)
    assert y2.shape == (B, C_OUT, H, W)
    assert net.get_state_nchw().shape == (B, C_HID, H, W)
    assert bool(jnp.all(jnp.isfinite(y1))) and bool(jnp.all(jnp.isfinite(y2)))

    # correctness cross-check of the Pallas step against a pure-JAX reference.
    # reference runs FIRST because gru_step donates its state argument.
    p = H * W
    tile_n = _pick_tile_n(p, B)
    n_pad = -(-p // tile_n) * tile_n
    h0 = jax.random.normal(k_h, (B, C_HID, n_pad), dtype=jnp.float32)
    y_r, h_r = reference_step(params, x1, h0)
    y_r, h_r = jax.block_until_ready(y_r), jax.block_until_ready(h_r)
    y_k, h_k = gru_step(params, x1, h0, tile_n=tile_n, n_pad=n_pad)
    y_k, h_k = jax.block_until_ready(y_k), jax.block_until_ready(h_k)
    # 1e-4: any gate/layout/offset bug produces O(1) errors; headroom left for
    # bf16 matmul inputs + EUP-vs-XLA transcendental rounding differences.
    assert jnp.allclose(y_k, y_r, atol=1e-4, rtol=1e-4), \
        float(jnp.max(jnp.abs(y_k - y_r)))
    assert jnp.allclose(h_k, h_r, atol=1e-4, rtol=1e-4), \
        float(jnp.max(jnp.abs(h_k - h_r)))

    print("KERNEL_OK")
</pallas_src>

<mosaic_0001>
module attributes {stable_mosaic.version = 11 : i64} {
  func.func @gru_head_kernel(%arg0: i32, %arg1: i32, %arg2: memref<1x4x128xf32, #tpu.memory_space<vmem>>, %arg3: memref<1x32x128xf32, #tpu.memory_space<vmem>>, %arg4: memref<96x4xbf16, #tpu.memory_space<vmem>>, %arg5: memref<96x32xbf16, #tpu.memory_space<vmem>>, %arg6: memref<96x1xf32, #tpu.memory_space<vmem>>, %arg7: memref<32x1xf32, #tpu.memory_space<vmem>>, %arg8: memref<8x32xbf16, #tpu.memory_space<vmem>>, %arg9: memref<2x1xf32, #tpu.memory_space<vmem>>, %arg10: memref<1x2x128xf32, #tpu.memory_space<vmem>>, %arg11: memref<1x32x128xf32, #tpu.memory_space<vmem>>) attributes {dimension_semantics = [#tpu.dimension_semantics<parallel>, #tpu.dimension_semantics<parallel>], iteration_bounds = array<i64: 2, 2>, scalar_prefetch = 0 : i64, scratch_operands = 0 : i64, tpu.core_type = #tpu.core_type<tc>, window_params = [{transform_indices = @transform_0, window_bounds = array<i64: 1, 4, 128>}, {transform_indices = @transform_1, window_bounds = array<i64: 1, 32, 128>}, {pipeline_mode = #tpu.pipeline_mode<synchronous>, transform_indices = @transform_2, window_bounds = array<i64: 96, 4>}, {pipeline_mode = #tpu.pipeline_mode<synchronous>, transform_indices = @transform_3, window_bounds = array<i64: 96, 32>}, {pipeline_mode = #tpu.pipeline_mode<synchronous>, transform_indices = @transform_4, window_bounds = array<i64: 96, 1>}, {pipeline_mode = #tpu.pipeline_mode<synchronous>, transform_indices = @transform_5, window_bounds = array<i64: 32, 1>}, {pipeline_mode = #tpu.pipeline_mode<synchronous>, transform_indices = @transform_6, window_bounds = array<i64: 8, 32>}, {pipeline_mode = #tpu.pipeline_mode<synchronous>, transform_indices = @transform_7, window_bounds = array<i64: 2, 1>}, {transform_indices = @transform_8, window_bounds = array<i64: 1, 2, 128>}, {transform_indices = @transform_9, window_bounds = array<i64: 1, 32, 128>}]} {
    %c0 = arith.constant 0 : index
    %c0_0 = arith.constant 0 : index
    %c0_1 = arith.constant 0 : index
    %0 = vector.load %arg3[%c0, %c0_0, %c0_1] : memref<1x32x128xf32, #tpu.memory_space<vmem>>, vector<1x32x128xf32>
    %1 = vector.shape_cast %0 : vector<1x32x128xf32> to vector<32x128xf32>
    %c0_2 = arith.constant 0 : index
    %c0_3 = arith.constant 0 : index
    %c0_4 = arith.constant 0 : index
    %2 = vector.load %arg2[%c0_2, %c0_3, %c0_4] : memref<1x4x128xf32, #tpu.memory_space<vmem>>, vector<1x4x128xf32>
    %3 = vector.shape_cast %2 : vector<1x4x128xf32> to vector<4x128xf32>
    %4 = arith.truncf %3 : vector<4x128xf32> to vector<4x128xbf16>
    %5 = arith.truncf %1 : vector<32x128xf32> to vector<32x128xbf16>
    %c0_5 = arith.constant 0 : index
    %c0_6 = arith.constant 0 : index
    %6 = vector.load %arg4[%c0_5, %c0_6] : memref<96x4xbf16, #tpu.memory_space<vmem>>, vector<96x4xbf16>
    %cst = arith.constant dense<0.000000e+00> : vector<96x128xf32>
    %7 = tpu.matmul %6, %4, %cst {dimension_numbers = #tpu.dot_dimension_numbers<[1], [0], [0], [1], [0, 0, 1, 1], [], []>} : vector<96x4xbf16>, vector<4x128xbf16>, vector<96x128xf32> -> vector<96x128xf32>
    %c0_7 = arith.constant 0 : index
    %c0_8 = arith.constant 0 : index
    %8 = vector.load %arg6[%c0_7, %c0_8] : memref<96x1xf32, #tpu.memory_space<vmem>>, vector<96x1xf32>
    %9 = vector.broadcast %8 : vector<96x1xf32> to vector<96x128xf32>
    %10 = arith.addf %7, %9 : vector<96x128xf32>
    %c0_9 = arith.constant 0 : index
    %c0_10 = arith.constant 0 : index
    %11 = vector.load %arg5[%c0_9, %c0_10] : memref<96x32xbf16, #tpu.memory_space<vmem>>, vector<96x32xbf16>
    %cst_11 = arith.constant dense<0.000000e+00> : vector<96x128xf32>
    %12 = tpu.matmul %11, %5, %cst_11 {dimension_numbers = #tpu.dot_dimension_numbers<[1], [0], [0], [1], [0, 0, 1, 1], [], []>} : vector<96x32xbf16>, vector<32x128xbf16>, vector<96x128xf32> -> vector<96x128xf32>
    %13 = vector.extract_strided_slice %10 {offsets = [0, 0], sizes = [64, 128], strides = [1, 1]} : vector<96x128xf32> to vector<64x128xf32>
    %14 = vector.extract_strided_slice %12 {offsets = [0, 0], sizes = [64, 128], strides = [1, 1]} : vector<96x128xf32> to vector<64x128xf32>
    %15 = arith.addf %13, %14 : vector<64x128xf32>
    %16 = arith.negf %15 : vector<64x128xf32>
    %17 = math.exp %16 : vector<64x128xf32>
    %cst_12 = arith.constant 1.000000e+00 : f32
    %18 = vector.broadcast %cst_12 : f32 to vector<64x128xf32>
    %19 = arith.addf %18, %17 : vector<64x128xf32>
    %20 = arith.divf %18, %19 : vector<64x128xf32>
    %21 = vector.extract_strided_slice %20 {offsets = [0, 0], sizes = [32, 128], strides = [1, 1]} : vector<64x128xf32> to vector<32x128xf32>
    %22 = vector.extract_strided_slice %20 {offsets = [32, 0], sizes = [32, 128], strides = [1, 1]} : vector<64x128xf32> to vector<32x128xf32>
    %23 = vector.extract_strided_slice %10 {offsets = [64, 0], sizes = [32, 128], strides = [1, 1]} : vector<96x128xf32> to vector<32x128xf32>
    %24 = vector.extract_strided_slice %12 {offsets = [64, 0], sizes = [32, 128], strides = [1, 1]} : vector<96x128xf32> to vector<32x128xf32>
    %c0_13 = arith.constant 0 : index
    %c0_14 = arith.constant 0 : index
    %25 = vector.load %arg7[%c0_13, %c0_14] : memref<32x1xf32, #tpu.memory_space<vmem>>, vector<32x1xf32>
    %26 = vector.broadcast %25 : vector<32x1xf32> to vector<32x128xf32>
    %27 = arith.addf %24, %26 : vector<32x128xf32>
    %28 = arith.mulf %21, %27 : vector<32x128xf32>
    %29 = arith.addf %23, %28 : vector<32x128xf32>
    %30 = math.tanh %29 : vector<32x128xf32>
    %cst_15 = arith.constant 1.000000e+00 : f32
    %31 = vector.broadcast %cst_15 : f32 to vector<32x128xf32>
    %32 = arith.subf %31, %22 : vector<32x128xf32>
    %33 = arith.mulf %32, %30 : vector<32x128xf32>
    %34 = arith.mulf %22, %1 : vector<32x128xf32>
    %35 = arith.addf %33, %34 : vector<32x128xf32>
    %c0_16 = arith.constant 0 : index
    %c0_17 = arith.constant 0 : index
    %c0_18 = arith.constant 0 : index
    %36 = vector.load %arg11[%c0_16, %c0_17, %c0_18] : memref<1x32x128xf32, #tpu.memory_space<vmem>>, vector<1x32x128xf32>
    %37 = vector.shape_cast %36 : vector<1x32x128xf32> to vector<32x128xf32>
    %38 = vector.shape_cast %35 : vector<32x128xf32> to vector<1x32x128xf32>
    tpu.vector_store %arg11[%c0_16, %c0_17, %c0_18], %38 {strides = array<i32>} : memref<1x32x128xf32, #tpu.memory_space<vmem>>, vector<1x32x128xf32>,
    %c0_19 = arith.constant 0 : index
    %c0_20 = arith.constant 0 : index
    %39 = vector.load %arg8[%c0_19, %c0_20] : memref<8x32xbf16, #tpu.memory_space<vmem>>, vector<8x32xbf16>
    %40 = arith.truncf %35 : vector<32x128xf32> to vector<32x128xbf16>
    %cst_21 = arith.constant dense<0.000000e+00> : vector<8x128xf32>
    %41 = tpu.matmul %39, %40, %cst_21 {dimension_numbers = #tpu.dot_dimension_numbers<[1], [0], [0], [1], [0, 0, 1, 1], [], []>} : vector<8x32xbf16>, vector<32x128xbf16>, vector<8x128xf32> -> vector<8x128xf32>
    %42 = vector.extract_strided_slice %41 {offsets = [0, 0], sizes = [2, 128], strides = [1, 1]} : vector<8x128xf32> to vector<2x128xf32>
    %c0_22 = arith.constant 0 : index
    %c0_23 = arith.constant 0 : index
    %43 = vector.load %arg9[%c0_22, %c0_23] : memref<2x1xf32, #tpu.memory_space<vmem>>, vector<2x1xf32>
    %44 = vector.broadcast %43 : vector<2x1xf32> to vector<2x128xf32>
    %45 = arith.addf %42, %44 : vector<2x128xf32>
    %c0_24 = arith.constant 0 : index
    %c0_25 = arith.constant 0 : index
    %c0_26 = arith.constant 0 : index
    %46 = vector.load %arg10[%c0_24, %c0_25, %c0_26] : memref<1x2x128xf32, #tpu.memory_space<vmem>>, vector<1x2x128xf32>
    %47 = vector.shape_cast %46 : vector<1x2x128xf32> to vector<2x128xf32>
    %48 = vector.shape_cast %45 : vector<2x128xf32> to vector<1x2x128xf32>
    tpu.vector_store %arg10[%c0_24, %c0_25, %c0_26], %48 {strides = array<i32>} : memref<1x2x128xf32, #tpu.memory_space<vmem>>, vector<1x2x128xf32>,
    return
  }
  func.func @transform_0(%arg0: i32, %arg1: i32) -> (i32, i32, i32) {
    %c0_i32 = arith.constant 0 : i32
    %c0_i32_0 = arith.constant 0 : i32
    return %arg0, %c0_i32, %arg1 : i32, i32, i32
  }
  func.func @transform_1(%arg0: i32, %arg1: i32) -> (i32, i32, i32) {
    %c0_i32 = arith.constant 0 : i32
    %c0_i32_0 = arith.constant 0 : i32
    return %arg0, %c0_i32, %arg1 : i32, i32, i32
  }
  func.func @transform_2(%arg0: i32, %arg1: i32) -> (i32, i32) {
    %c0_i32 = arith.constant 0 : i32
    %c0_i32_0 = arith.constant 0 : i32
    %c0_i32_1 = arith.constant 0 : i32
    return %c0_i32, %c0_i32_0 : i32, i32
  }
  func.func @transform_3(%arg0: i32, %arg1: i32) -> (i32, i32) {
    %c0_i32 = arith.constant 0 : i32
    %c0_i32_0 = arith.constant 0 : i32
    %c0_i32_1 = arith.constant 0 : i32
    return %c0_i32, %c0_i32_0 : i32, i32
  }
  func.func @transform_4(%arg0: i32, %arg1: i32) -> (i32, i32) {
    %c0_i32 = arith.constant 0 : i32
    %c0_i32_0 = arith.constant 0 : i32
    %c0_i32_1 = arith.constant 0 : i32
    return %c0_i32, %c0_i32_0 : i32, i32
  }
  func.func @transform_5(%arg0: i32, %arg1: i32) -> (i32, i32) {
    %c0_i32 = arith.constant 0 : i32
    %c0_i32_0 = arith.constant 0 : i32
    %c0_i32_1 = arith.constant 0 : i32
    return %c0_i32, %c0_i32_0 : i32, i32
  }
  func.func @transform_6(%arg0: i32, %arg1: i32) -> (i32, i32) {
    %c0_i32 = arith.constant 0 : i32
    %c0_i32_0 = arith.constant 0 : i32
    %c0_i32_1 = arith.constant 0 : i32
    return %c0_i32, %c0_i32_0 : i32, i32
  }
  func.func @transform_7(%arg0: i32, %arg1: i32) -> (i32, i32) {
    %c0_i32 = arith.constant 0 : i32
    %c0_i32_0 = arith.constant 0 : i32
    %c0_i32_1 = arith.constant 0 : i32
    return %c0_i32, %c0_i32_0 : i32, i32
  }
  func.func @transform_8(%arg0: i32, %arg1: i32) -> (i32, i32, i32) {
    %c0_i32 = arith.constant 0 : i32
    %c0_i32_0 = arith.constant 0 : i32
    return %arg0, %c0_i32, %arg1 : i32, i32, i32
  }
  func.func @transform_9(%arg0: i32, %arg1: i32) -> (i32, i32, i32) {
    %c0_i32 = arith.constant 0 : i32
    %c0_i32_0 = arith.constant 0 : i32
    return %arg0, %c0_i32, %arg1 : i32, i32, i32
  }
}

</mosaic_0001>

<llo_original>
// kernel: gru_step.1
$region0: #{gru_step.1}
  #allocation0 [shape = 'u32[]', space=smem, size = 0x4, offset = 0x4, fixed_abs, tag = 'smem constant byte address 0x4 - core index']
  #allocation1 [shape = 'u32[144,128]{1,0:T(1,128)}', space=vmem, size = 0x12000, scoped, tag = 'internal scratch']
  %s0 = inlined_call_operand.vmem [shape: f32[2,4,256], index: 0, kind: input, shape index: {}]
  %s1 = inlined_call_operand.vmem [shape: f32[2,32,256], index: 1, kind: input, shape index: {}, may-alias: {1,9}]
  %s2 = inlined_call_operand.vmem [shape: bf16[96,4], index: 2, kind: input, shape index: {}]
  %s3 = inlined_call_operand.vmem [shape: bf16[96,32], index: 3, kind: input, shape index: {}]
  %s4 = inlined_call_operand.vmem [shape: f32[96,1], index: 4, kind: input, shape index: {}]
  %s5 = inlined_call_operand.vmem [shape: f32[32,1], index: 5, kind: input, shape index: {}]
  %s6 = inlined_call_operand.vmem [shape: bf16[8,32], index: 6, kind: input, shape index: {}]
  %s7 = inlined_call_operand.vmem [shape: f32[2,1], index: 7, kind: input, shape index: {}]
  %s8 = inlined_call_operand.vmem [shape: f32[2,2,256], index: 8, kind: output, shape index: {0}]
  %s9 = inlined_call_operand.vmem [shape: f32[2,32,256], index: 9, kind: output, shape index: {1}, may-alias: {1,9}]
  %10 = xla_tuple %s8, %s9
  %s11 = sld [smem:[#allocation0]]
  $region145: #{gru_step.1} parent=0
    _
  %s13 = ssub.s32 1, %s11
  %s14 = scalar_select 0, %s13, %s11
  $region1: #{gru_step.1} parent=0
    #allocation2 [shape = 'u8[32768]{0}', space=vmem, size = 0x8000, scoped, tag = 'input window, operand 1']
    #allocation3 [shape = 'u8[32768]{0}', space=vmem, size = 0x8000, scoped, tag = 'output window, operand 1']
    loop: start=0, step=1, limit=6
    $region2: #{gru_step.1} parent=1 // loop_pre_header
      _
    $region3: #{gru_step.1} parent=1 // loop_header
      %s16 = sphi 0, %s20
      %p17 = scmp.ge.s32.totalorder %s16, 6
      %s23 = sphi 0, %s35
      %s24 = sphi 0, %s31
      %s25 = sphi 0, %s23
      %s26 = sphi 0, %s24
      %s27 = sphi 0, %s25
      %s28 = sphi 0, %s26
      %s40 = sphi 0, %s42
      %s43 = sphi 0, %s40
      %s44 = sphi 0, %s43
      %s60 = sphi 0, %s44
      %s68 = sphi 0, %s70
      %s71 = sphi 0, %s68
      %s72 = sphi 0, %s71
      %s88 = sphi 0, %s72
      %s92 = sphi 0, %s92
      %s94 = sphi 0, %s92
      %s95 = sphi 0, %s94
      %s109 = sphi 0, %s95
      %s113 = sphi 0, %s113
      %s115 = sphi 0, %s113
      %s116 = sphi 0, %s115
      %s130 = sphi 0, %s116
      %s134 = sphi 0, %s134
      %s136 = sphi 0, %s134
      %s137 = sphi 0, %s136
      %s151 = sphi 0, %s137
      %s155 = sphi 0, %s155
      %s157 = sphi 0, %s155
      %s158 = sphi 0, %s157
      %s172 = sphi 0, %s158
      %s176 = sphi 0, %s176
      %s178 = sphi 0, %s176
      %s179 = sphi 0, %s178
      %s193 = sphi 0, %s179
      %s197 = sphi 0, %s197
      %s199 = sphi 0, %s197
      %s200 = sphi 0, %s199
      %s214 = sphi 0, %s200
      %s222 = sphi 0, %s224
      %s225 = sphi 0, %s222
      %s226 = sphi 0, %s225
      %s242 = sphi 0, %s226
      %s250 = sphi 0, %s252
      %s253 = sphi 0, %s250
      %s254 = sphi 0, %s253
      %s270 = sphi 0, %s254
    $region4: #{gru_step.1} parent=1 // loop_header_branch
      %19 = sbr.rel (%p17) target = $region8
    $region5: #{gru_step.1} parent=1 // loop_body
      %s21 = ssub.s32 %s16, 1
      %s22 = ssub.s32 %s16, 2
      %s29 = sadd.s32 1, %s24
      %p30 = scmp.ge.s32.totalorder %s29, 2
      %s31 = scalar_select %p30, 0, %s29
      %s32 = sadd.s32 1, %s23
      %s33 = scalar_select %p30, %s32, %s23
      %p34 = scmp.ge.s32.totalorder %s33, 2
      %s35 = scalar_select %p34, 0, %s33
      %s36 = ssub.s32 %s23, %s35
      %s37 = ssub.s32 %s24, %s31
      %s38 = sor.u32 %s36, %s37
      %p39 = scmp.eq.s32.totalorder %s38, 0
      %s41 = sadd.s32 %s40, 1
      %s42 = scalar_select %p39, %s40, %s41
      %p45 = pneg %p39
      %p46 = scmp.eq.s32.totalorder %s16, 3
      %p47 = por %p45, %p46
      %p48 = scmp.ne.s32.totalorder %s40, %s43
      %p49 = scmp.eq.s32.totalorder %s16, 0
      %p50 = por %p48, %p49
      %p51 = scmp.ne.s32.totalorder %s40, %s43
      %p52 = scmp.eq.s32.totalorder %s21, 3
      %p53 = por %p51, %p52
      %p54 = scmp.ne.s32.totalorder %s43, %s44
      %p55 = scmp.eq.s32.totalorder %s21, 0
      %p56 = por %p54, %p55
      %p57 = scmp.ne.s32.totalorder %s43, %s44
      %p58 = scmp.eq.s32.totalorder %s22, 3
      %p59 = por %p57, %p58
      %p61 = scmp.ne.s32.totalorder %s44, %s60
      %p62 = scmp.eq.s32.totalorder %s22, 0
      %p63 = por %p61, %p62
      %s64 = ssub.s32 %s23, %s35
      %s65 = ssub.s32 %s24, %s31
      %s66 = sor.u32 %s64, %s65
      %p67 = scmp.eq.s32.totalorder %s66, 0
      %s69 = sadd.s32 %s68, 1
      %s70 = scalar_select %p67, %s68, %s69
      %p73 = pneg %p67
      %p74 = scmp.eq.s32.totalorder %s16, 3
      %p75 = por %p73, %p74
      %p76 = scmp.ne.s32.totalorder %s68, %s71
      %p77 = scmp.eq.s32.totalorder %s16, 0
      %p78 = por %p76, %p77
      %p79 = scmp.ne.s32.totalorder %s68, %s71
      %p80 = scmp.eq.s32.totalorder %s21, 3
      %p81 = por %p79, %p80
      %p82 = scmp.ne.s32.totalorder %s71, %s72
      %p83 = scmp.eq.s32.totalorder %s21, 0
      %p84 = por %p82, %p83
      %p85 = scmp.ne.s32.totalorder %s71, %s72
      %p86 = scmp.eq.s32.totalorder %s22, 3
      %p87 = por %p85, %p86
      %p89 = scmp.ne.s32.totalorder %s72, %s88
      %p90 = scmp.eq.s32.totalorder %s22, 0
      %p91 = por %p89, %p90
      %s93 = sadd.s32 %s92, 1
      %p96 = scmp.eq.s32.totalorder %s16, 3
      %p97 = scmp.ne.s32.totalorder %s92, %s94
      %p98 = scmp.eq.s32.totalorder %s16, 0
      %p99 = por %p97, %p98
      %p100 = scmp.ne.s32.totalorder %s92, %s94
      %p101 = scmp.eq.s32.totalorder %s21, 3
      %p102 = por %p100, %p101
      %p103 = scmp.ne.s32.totalorder %s94, %s95
      %p104 = scmp.eq.s32.totalorder %s21, 0
      %p105 = por %p103, %p104
      %p106 = scmp.ne.s32.totalorder %s94, %s95
      %p107 = scmp.eq.s32.totalorder %s22, 3
      %p108 = por %p106, %p107
      %p110 = scmp.ne.s32.totalorder %s95, %s109
      %p111 = scmp.eq.s32.totalorder %s22, 0
      %p112 = por %p110, %p111
      %s114 = sadd.s32 %s113, 1
      %p117 = scmp.eq.s32.totalorder %s16, 3
      %p118 = scmp.ne.s32.totalorder %s113, %s115
      %p119 = scmp.eq.s32.totalorder %s16, 0
      %p120 = por %p118, %p119
      %p121 = scmp.ne.s32.totalorder %s113, %s115
      %p122 = scmp.eq.s32.totalorder %s21, 3
      %p123 = por %p121, %p122
      %p124 = scmp.ne.s32.totalorder %s115, %s116
      %p125 = scmp.eq.s32.totalorder %s21, 0
      %p126 = por %p124, %p125
      %p127 = scmp.ne.s32.totalorder %s115, %s116
      %p128 = scmp.eq.s32.totalorder %s22, 3
      %p129 = por %p127, %p128
      %p131 = scmp.ne.s32.totalorder %s116, %s130
      %p132 = scmp.eq.s32.totalorder %s22, 0
      %p133 = por %p131, %p132
      %s135 = sadd.s32 %s134, 1
      %p138 = scmp.eq.s32.totalorder %s16, 3
      %p139 = scmp.ne.s32.totalorder %s134, %s136
      %p140 = scmp.eq.s32.totalorder %s16, 0
      %p141 = por %p139, %p140
      %p142 = scmp.ne.s32.totalorder %s134, %s136
      %p143 = scmp.eq.s32.totalorder %s21, 3
      %p144 = por %p142, %p143
      %p145 = scmp.ne.s32.totalorder %s136, %s137
      %p146 = scmp.eq.s32.totalorder %s21, 0
      %p147 = por %p145, %p146
      %p148 = scmp.ne.s32.totalorder %s136, %s137
      %p149 = scmp.eq.s32.totalorder %s22, 3
      %p150 = por %p148, %p149
      %p152 = scmp.ne.s32.totalorder %s137, %s151
      %p153 = scmp.eq.s32.totalorder %s22, 0
      %p154 = por %p152, %p153
      %s156 = sadd.s32 %s155, 1
      %p159 = scmp.eq.s32.totalorder %s16, 3
      %p160 = scmp.ne.s32.totalorder %s155, %s157
      %p161 = scmp.eq.s32.totalorder %s16, 0
      %p162 = por %p160, %p161
      %p163 = scmp.ne.s32.totalorder %s155, %s157
      %p164 = scmp.eq.s32.totalorder %s21, 3
      %p165 = por %p163, %p164
      %p166 = scmp.ne.s32.totalorder %s157, %s158
      %p167 = scmp.eq.s32.totalorder %s21, 0
      %p168 = por %p166, %p167
      %p169 = scmp.ne.s32.totalorder %s157, %s158
      %p170 = scmp.eq.s32.totalorder %s22, 3
      %p171 = por %p169, %p170
      %p173 = scmp.ne.s32.totalorder %s158, %s172
      %p174 = scmp.eq.s32.totalorder %s22, 0
      %p175 = por %p173, %p174
      %s177 = sadd.s32 %s176, 1
      %p180 = scmp.eq.s32.totalorder %s16, 3
      %p181 = scmp.ne.s32.totalorder %s176, %s178
      %p182 = scmp.eq.s32.totalorder %s16, 0
      %p183 = por %p181, %p182
      %p184 = scmp.ne.s32.totalorder %s176, %s178
      %p185 = scmp.eq.s32.totalorder %s21, 3
      %p186 = por %p184, %p185
      %p187 = scmp.ne.s32.totalorder %s178, %s179
      %p188 = scmp.eq.s32.totalorder %s21, 0
      %p189 = por %p187, %p188
      %p190 = scmp.ne.s32.totalorder %s178, %s179
      %p191 = scmp.eq.s32.totalorder %s22, 3
      %p192 = por %p190, %p191
      %p194 = scmp.ne.s32.totalorder %s179, %s193
      %p195 = scmp.eq.s32.totalorder %s22, 0
      %p196 = por %p194, %p195
      %s198 = sadd.s32 %s197, 1
      %p201 = scmp.eq.s32.totalorder %s16, 3
      %p202 = scmp.ne.s32.totalorder %s197, %s199
      %p203 = scmp.eq.s32.totalorder %s16, 0
      %p204 = por %p202, %p203
      %p205 = scmp.ne.s32.totalorder %s197, %s199
      %p206 = scmp.eq.s32.totalorder %s21, 3
      %p207 = por %p205, %p206
      %p208 = scmp.ne.s32.totalorder %s199, %s200
      %p209 = scmp.eq.s32.totalorder %s21, 0
      %p210 = por %p208, %p209
      %p211 = scmp.ne.s32.totalorder %s199, %s200
      %p212 = scmp.eq.s32.totalorder %s22, 3
      %p213 = por %p211, %p212
      %p215 = scmp.ne.s32.totalorder %s200, %s214
      %p216 = scmp.eq.s32.totalorder %s22, 0
      %p217 = por %p215, %p216
      %s218 = ssub.s32 %s23, %s35
      %s219 = ssub.s32 %s24, %s31
      %s220 = sor.u32 %s218, %s219
      %p221 = scmp.eq.s32.totalorder %s220, 0
      %s223 = sadd.s32 %s222, 1
      %s224 = scalar_select %p221, %s222, %s223
      %p227 = pneg %p221
      %p228 = scmp.eq.s32.totalorder %s16, 3
      %p229 = por %p227, %p228
      %p230 = scmp.ne.s32.totalorder %s222, %s225
      %p231 = scmp.eq.s32.totalorder %s16, 0
      %p232 = por %p230, %p231
      %p233 = scmp.ne.s32.totalorder %s222, %s225
      %p234 = scmp.eq.s32.totalorder %s21, 3
      %p235 = por %p233, %p234
      %p236 = scmp.ne.s32.totalorder %s225, %s226
      %p237 = scmp.eq.s32.totalorder %s21, 0
      %p238 = por %p236, %p237
      %p239 = scmp.ne.s32.totalorder %s225, %s226
      %p240 = scmp.eq.s32.totalorder %s22, 3
      %p241 = por %p239, %p240
      %p243 = scmp.ne.s32.totalorder %s226, %s242
      %p244 = scmp.eq.s32.totalorder %s22, 0
      %p245 = por %p243, %p244
      %s246 = ssub.s32 %s23, %s35
      %s247 = ssub.s32 %s24, %s31
      %s248 = sor.u32 %s246, %s247
      %p249 = scmp.eq.s32.totalorder %s248, 0
      %s251 = sadd.s32 %s250, 1
      %s252 = scalar_select %p249, %s250, %s251
      %p255 = pneg %p249
      %p256 = scmp.eq.s32.totalorder %s16, 3
      %p257 = por %p255, %p256
      %p258 = scmp.ne.s32.totalorder %s250, %s253
      %p259 = scmp.eq.s32.totalorder %s16, 0
      %p260 = por %p258, %p259
      %p261 = scmp.ne.s32.totalorder %s250, %s253
      %p262 = scmp.eq.s32.totalorder %s21, 3
      %p263 = por %p261, %p262
      %p264 = scmp.ne.s32.totalorder %s253, %s254
      %p265 = scmp.eq.s32.totalorder %s21, 0
      %p266 = por %p264, %p265
      %p267 = scmp.ne.s32.totalorder %s253, %s254
      %p268 = scmp.eq.s32.totalorder %s22, 3
      %p269 = por %p267, %p268
      %p271 = scmp.ne.s32.totalorder %s254, %s270
      %p272 = scmp.eq.s32.totalorder %s22, 0
      %p273 = por %p271, %p272
      %p274 = scmp.le.s32.totalorder 1, %s16
      %p275 = scmp.lt.s32.totalorder %s16, 5
      %p276 = pnand %p274, %p275
      %p277 = pneg %p276
      // Predicated region
      $region9: #{gru_step.1} parent=5 // pred_check
        _
      $region10: #{gru_step.1} parent=5 // pred_check_branch
        %279 = sbr.rel (%p276) target = $region12
      $region11: #{gru_step.1} parent=5 // pred_region
        %s280 = ssub.s32 %s16, 1
        // Predicated region
        $region13: #{gru_step.1} parent=11 // pred_check
          %p281 = pneg %p105
        $region14: #{gru_step.1} parent=11 // pred_check_branch
          %283 = sbr.rel (%p281) target = $region16
        $region15: #{gru_step.1} parent=11 // pred_region
          _
        $region16: #{gru_step.1} parent=11 // pred_fallthru
          _
        // Predicated region
        $region17: #{gru_step.1} parent=11 // pred_check
          %p284 = pneg %p126
        $region18: #{gru_step.1} parent=11 // pred_check_branch
          %286 = sbr.rel (%p284) target = $region20
        $region19: #{gru_step.1} parent=11 // pred_region
          _
        $region20: #{gru_step.1} parent=11 // pred_fallthru
          _
        // Predicated region
        $region21: #{gru_step.1} parent=11 // pred_check
          %p287 = pneg %p147
        $region22: #{gru_step.1} parent=11 // pred_check_branch
          %289 = sbr.rel (%p287) target = $region24
        $region23: #{gru_step.1} parent=11 // pred_region
          _
        $region24: #{gru_step.1} parent=11 // pred_fallthru
          _
        // Predicated region
        $region25: #{gru_step.1} parent=11 // pred_check
          %p290 = pneg %p168
        $region26: #{gru_step.1} parent=11 // pred_check_branch
          %292 = sbr.rel (%p290) target = $region28
        $region27: #{gru_step.1} parent=11 // pred_region
          _
        $region28: #{gru_step.1} parent=11 // pred_fallthru
          _
        // Predicated region
        $region29: #{gru_step.1} parent=11 // pred_check
          %p293 = pneg %p189
        $region30: #{gru_step.1} parent=11 // pred_check_branch
          %295 = sbr.rel (%p293) target = $region32
        $region31: #{gru_step.1} parent=11 // pred_region
          _
        $region32: #{gru_step.1} parent=11 // pred_fallthru
          _
        // Predicated region
        $region33: #{gru_step.1} parent=11 // pred_check
          %p296 = pneg %p210
        $region34: #{gru_step.1} parent=11 // pred_check_branch
          %298 = sbr.rel (%p296) target = $region36
        $region35: #{gru_step.1} parent=11 // pred_region
          _
        $region36: #{gru_step.1} parent=11 // pred_fallthru
          _
      $region12: #{gru_step.1} parent=5 // pred_fallthru
        _
      %p299 = scmp.lt.s32.totalorder %s16, 4
      // Predicated region
      $region37: #{gru_step.1} parent=5 // pred_check
        %p300 = pneg %p299
      $region38: #{gru_step.1} parent=5 // pred_check_branch
        %302 = sbr.rel (%p300) target = $region40
      $region39: #{gru_step.1} parent=5 // pred_region
        // Predicated region
        $region41: #{gru_step.1} parent=39 // pred_check
          %p303 = pneg %p50
        $region42: #{gru_step.1} parent=39 // pred_check_branch
          %305 = sbr.rel (%p303) target = $region44
        $region43: #{gru_step.1} parent=39 // pred_region
          %p306 = scmp.lt.s32.totalorder %s23, 1
          %s307 = scalar_select %p306, %s23, 1
          %p308 = scmp.lt.s32.totalorder %s24, 1
          %s309 = scalar_select %p308, %s24, 1
          %s310 = smul.addr %s307, 2
          %s311 = sadd.s32 %s309, %s310
          %s312 = smul.addr %s311, 4
          %s313 = scalar_lea.vmem %s0, %s312
        $region44: #{gru_step.1} parent=39 // pred_fallthru
          _
        // Predicated region
        $region45: #{gru_step.1} parent=39 // pred_check
          %p314 = pneg %p78
        $region46: #{gru_step.1} parent=39 // pred_check_branch
          %316 = sbr.rel (%p314) target = $region48
        $region47: #{gru_step.1} parent=39 // pred_region
          %s317 = sand.u32 %s68, 1
          %s318 = sand.u32 %s68, 1
          %s319 = smul.addr %s318, 32
          %s320 = scalar_lea.vmem [#allocation2], %s319
          %s321 = smul.addr %s23, 8
          %s322 = sadd.s32 %s24, %s321
          %s323 = smul.addr %s322, 8
          %s324 = scalar_lea.vmem %s1, %s323
          // Predicated region
          $region49: #{gru_step.1} parent=47 // pred_check
            _
          $region50: #{gru_step.1} parent=47 // pred_check_branch
            %326 = sbr.rel (0) target = $region52
          $region51: #{gru_step.1} parent=47 // pred_region
            // Predicated region
            $region53: #{gru_step.1} parent=51 // pred_check
              _
            $region54: #{gru_step.1} parent=51 // pred_check_branch
              %328 = sbr.rel (0) target = $region56
            $region55: #{gru_step.1} parent=51 // pred_region
              // Predicated region
              $region68: #{gru_step.1} parent=55 // pred_check
                _
              $region69: #{gru_step.1} parent=55 // pred_check_branch
                %349 = sbr.rel (0) target = $region71
              $region70: #{gru_step.1} parent=55 // pred_region
                loop: start=0, step=1, limit=1
                $region72: #{gru_step.1} parent=70 // loop_pre_header
                  _
                $region73: #{gru_step.1} parent=70 // loop_header
                  %s351 = sphi 0, %s355
                  %p352 = scmp.ge.s32.totalorder %s351, 1
                  %s356 = sphi %s324, %s324
                  %s357 = sphi %s320, %s320
                $region74: #{gru_step.1} parent=70 // loop_header_branch
                  %354 = sbr.rel (%p352) target = $region78
                $region75: #{gru_step.1} parent=70 // loop_body
                  %v358 = vld [vmem:[%s356] sm:$0xff]
                  %359 = vst [vmem:[%s357] sm:$0xff] %v358
                  %v360 = vld [vmem:[%s356 + $0x10] sm:$0xff]
                  %361 = vst [vmem:[%s357 + $0x8] sm:$0xff] %v360
                  %v362 = vld [vmem:[%s356 + $0x20] sm:$0xff]
                  %363 = vst [vmem:[%s357 + $0x10] sm:$0xff] %v362
                  %v364 = vld [vmem:[%s356 + $0x30] sm:$0xff]
                  %365 = vst [vmem:[%s357 + $0x18] sm:$0xff] %v364
                $region76: #{gru_step.1} parent=70 // loop_footer
                  %s355 = sadd.s32 1, %s351
                $region77: #{gru_step.1} parent=70 // loop_footer_branch
                  %350 = sbr.rel target = $region73
                $region78: #{gru_step.1} parent=70 // loop_exit
                  _
              $region71: #{gru_step.1} parent=55 // pred_fallthru
                _
              // Predicated region
              $region79: #{gru_step.1} parent=55 // pred_check
                _
              $region80: #{gru_step.1} parent=55 // pred_check_branch
                %367 = sbr.rel target = $region82
              $region81: #{gru_step.1} parent=55 // pred_region
                _
              $region82: #{gru_step.1} parent=55 // pred_fallthru
                _
            $region56: #{gru_step.1} parent=51 // pred_fallthru
              _
            // Predicated region
            $region57: #{gru_step.1} parent=51 // pred_check
              _
            $region58: #{gru_step.1} parent=51 // pred_check_branch
              %330 = sbr.rel target = $region60
            $region59: #{gru_step.1} parent=51 // pred_region
              loop: start=0, step=1, limit=1
              $region61: #{gru_step.1} parent=59 // loop_pre_header
                _
              $region62: #{gru_step.1} parent=59 // loop_header
                %s333 = sphi 0, %s337
                %p334 = scmp.ge.s32.totalorder %s333, 1
                %s338 = sphi %s324, %s324
                %s339 = sphi %s320, %s320
              $region63: #{gru_step.1} parent=59 // loop_header_branch
                %336 = sbr.rel (%p334) target = $region67
              $region64: #{gru_step.1} parent=59 // loop_body
                %v340 = vld [vmem:[%s338] sm:$0xff]
                %341 = vst [vmem:[%s339] sm:$0xff] %v340
                %v342 = vld [vmem:[%s338 + $0x10] sm:$0xff]
                %343 = vst [vmem:[%s339 + $0x8] sm:$0xff] %v342
                %v344 = vld [vmem:[%s338 + $0x20] sm:$0xff]
                %345 = vst [vmem:[%s339 + $0x10] sm:$0xff] %v344
                %v346 = vld [vmem:[%s338 + $0x30] sm:$0xff]
                %347 = vst [vmem:[%s339 + $0x18] sm:$0xff] %v346
              $region65: #{gru_step.1} parent=59 // loop_footer
                %s337 = sadd.s32 1, %s333
              $region66: #{gru_step.1} parent=59 // loop_footer_branch
                %332 = sbr.rel target = $region62
              $region67: #{gru_step.1} parent=59 // loop_exit
                _
            $region60: #{gru_step.1} parent=51 // pred_fallthru
              _
          $region52: #{gru_step.1} parent=47 // pred_fallthru
            _
          %368 = vnop
        $region48: #{gru_step.1} parent=39 // pred_fallthru
          _
      $region40: #{gru_step.1} parent=5 // pred_fallthru
        _
      %p369 = scmp.le.s32.totalorder 1, %s16
      %p370 = scmp.lt.s32.totalorder %s16, 5
      %p371 = pnand %p369, %p370
      %p372 = pneg %p371
      // Predicated region
      $region83: #{gru_step.1} parent=5 // pred_check
        _
      $region84: #{gru_step.1} parent=5 // pred_check_branch
        %374 = sbr.rel (%p371) target = $region86
      $region85: #{gru_step.1} parent=5 // pred_region
        %s375 = ssub.s32 %s16, 1
        %s376 = sand.u32 %s71, 1
        %s377 = sand.u32 %s71, 1
        %s378 = smul.addr %s377, 32
        %s379 = scalar_lea.vmem [#allocation2], %s378
        // Predicated region
        $region87: #{gru_step.1} parent=85 // pred_check
          %p380 = pneg %p84
        $region88: #{gru_step.1} parent=85 // pred_check_branch
          %382 = sbr.rel (%p380) target = $region90
        $region89: #{gru_step.1} parent=85 // pred_region
          _
        $region90: #{gru_step.1} parent=85 // pred_fallthru
          _
        %p383 = scmp.lt.s32.totalorder %s25, 1
        %s384 = scalar_select %p383, %s25, 1
        %p385 = scmp.lt.s32.totalorder %s26, 1
        %s386 = scalar_select %p385, %s26, 1
        %s387 = smul.addr %s384, 2
        %s388 = sadd.s32 %s386, %s387
        %s389 = smul.addr %s388, 4
        %s390 = scalar_lea.vmem %s0, %s389
        %p391 = pneg %p56
        %p392 = pneg %p53
        %s393 = sand.u32 %s71, 1
        %s394 = sand.u32 %s71, 1
        %s395 = smul.addr %s394, 32
        %s396 = scalar_lea.vmem [#allocation2], %s395
        %p397 = pneg %p84
        %p398 = pneg %p81
        %p399 = pneg %p105
        %p400 = pneg %p102
        %p401 = pneg %p126
        %p402 = pneg %p123
        %p403 = pneg %p147
        %p404 = pneg %p144
        %p405 = pneg %p168
        %p406 = pneg %p165
        %p407 = pneg %p189
        %p408 = pneg %p186
        %p409 = pneg %p210
        %p410 = pneg %p207
        %p411 = pneg %p238
        %p412 = pneg %p235
        %p413 = scmp.lt.s32.totalorder %s25, 1
        %s414 = scalar_select %p413, %s25, 1
        %p415 = scmp.lt.s32.totalorder %s26, 1
        %s416 = scalar_select %p415, %s26, 1
        %s417 = smul.addr %s414, 2
        %s418 = sadd.s32 %s416, %s417
        %s419 = smul.addr %s418, 2
        %s420 = scalar_lea.vmem %s8, %s419
        %p421 = pneg %p266
        %p422 = pneg %p263
        %s423 = sand.u32 %s253, 1
        %s424 = sand.u32 %s253, 1
        %s425 = smul.addr %s424, 32
        %s426 = scalar_lea.vmem [#allocation3], %s425
        %p427 = scmp.lt.s32.totalorder %s25, 1
        %s428 = scalar_select %p427, %s25, 1
        %p429 = scmp.lt.s32.totalorder %s26, 1
        %s430 = scalar_select %p429, %s26, 1
        %s431 = smul.addr %s428, 2
        %s432 = sadd.s32 %s430, %s431
        %s433 = smul.addr %s432, 4
        %s434 = scalar_lea.vmem %s0, %s433
        %p435 = scmp.lt.s32.totalorder %s25, 1
        %s436 = scalar_select %p435, %s25, 1
        %p437 = scmp.lt.s32.totalorder %s26, 1
        %s438 = scalar_select %p437, %s26, 1
        %s439 = smul.addr %s436, 2
        %s440 = sadd.s32 %s438, %s439
        %s441 = smul.addr %s440, 2
        %s442 = scalar_lea.vmem %s8, %s441
        %v444 = vld [vmem:[%s379] sm:$0xff]
        %v445 = vld [vmem:[%s379 + $0x8] sm:$0xff]
        %v446 = vld [vmem:[%s379 + $0x10] sm:$0xff]
        %v447 = vld [vmem:[%s379 + $0x18] sm:$0xff]
        %v448 = vld [vmem:[%s434] sm:$0xf]
        %v449 = vpack.c.bf16 %v448, %v448
        %v450 = vpack.c.bf16 %v445, %v444
        %v451 = vpack.c.bf16 %v447, %v446
        %v452 = vld [vmem:[%s2] sm:$0xf]
        %v453 = vld [vmem:[%s2 + $0x4] sm:$0xf]
        %v454 = vld [vmem:[%s2 + $0x8] sm:$0xf]
        %v455 = vld [vmem:[%s2 + $0xc] sm:$0xf]
        %v456 = vld [vmem:[%s2 + $0x10] sm:$0xf]
        %v457 = vld [vmem:[%s2 + $0x14] sm:$0xf]
        %v458 = vld [vmem:[%s2 + $0x18] sm:$0xf]
        %v459 = vld [vmem:[%s2 + $0x1c] sm:$0xf]
        %v460 = vld [vmem:[%s2 + $0x20] sm:$0xf]
        %v461 = vld [vmem:[%s2 + $0x24] sm:$0xf]
        %v462 = vld [vmem:[%s2 + $0x28] sm:$0xf]
        %v463 = vld [vmem:[%s2 + $0x2c] sm:$0xf]
        %v464 = vld [vmem:[%s4] sm:$0xff]
        %v465 = vld [vmem:[%s4 + $0x8] sm:$0xff]
        %v466 = vld [vmem:[%s4 + $0x10] sm:$0xff]
        %v467 = vld [vmem:[%s4 + $0x18] sm:$0xff]
        %v468 = vld [vmem:[%s4 + $0x20] sm:$0xff]
        %v469 = vld [vmem:[%s4 + $0x28] sm:$0xff]
        %v470 = vld [vmem:[%s4 + $0x30] sm:$0xff]
        %v471 = vld [vmem:[%s4 + $0x38] sm:$0xff]
        %v472 = vld [vmem:[%s4 + $0x40] sm:$0xff]
        %v473 = vld [vmem:[%s4 + $0x48] sm:$0xff]
        %v474 = vld [vmem:[%s4 + $0x50] sm:$0xff]
        %v475 = vld [vmem:[%s4 + $0x58] sm:$0xff]
        %477 = vset.pattern.permute.xlu0 0
        %478 = vperm.xlu0 %477, %v464
        %v479 = vpop.permute.xlu0 %478
        %482 = vset.pattern.permute.xlu0 0
        %483 = vperm.xlu0 %482, %v465
        %v484 = vpop.permute.xlu0 %483
        %487 = vset.pattern.permute.xlu0 0
        %488 = vperm.xlu0 %487, %v466
        %v489 = vpop.permute.xlu0 %488
        %492 = vset.pattern.permute.xlu0 0
        %493 = vperm.xlu0 %492, %v467
        %v494 = vpop.permute.xlu0 %493
        %497 = vset.pattern.permute.xlu0 0
        %498 = vperm.xlu0 %497, %v468
        %v499 = vpop.permute.xlu0 %498
        %502 = vset.pattern.permute.xlu0 0
        %503 = vperm.xlu0 %502, %v469
        %v504 = vpop.permute.xlu0 %503
        %507 = vset.pattern.permute.xlu0 0
        %508 = vperm.xlu0 %507, %v470
        %v509 = vpop.permute.xlu0 %508
        %512 = vset.pattern.permute.xlu0 0
        %513 = vperm.xlu0 %512, %v471
        %v514 = vpop.permute.xlu0 %513
        %517 = vset.pattern.permute.xlu0 0
        %518 = vperm.xlu0 %517, %v472
        %v519 = vpop.permute.xlu0 %518
        %522 = vset.pattern.permute.xlu0 0
        %523 = vperm.xlu0 %522, %v473
        %v524 = vpop.permute.xlu0 %523
        %527 = vset.pattern.permute.xlu0 0
        %528 = vperm.xlu0 %527, %v474
        %v529 = vpop.permute.xlu0 %528
        %532 = vset.pattern.permute.xlu0 0
        %533 = vperm.xlu0 %532, %v475
        %v534 = vpop.permute.xlu0 %533
        %v548 = vunpack.c.l.b16 %v452
        %v549 = vunpack.c.l.b16 %v453
        %v550 = vunpack.c.l.b16 %v454
        %v551 = vunpack.c.l.b16 %v455
        %v552 = vunpack.c.l.b16 %v456
        %v553 = vunpack.c.l.b16 %v457
        %v554 = vunpack.c.l.b16 %v458
        %v555 = vunpack.c.l.b16 %v459
        %v556 = vunpack.c.l.b16 %v460
        %v557 = vunpack.c.l.b16 %v461
        %v558 = vunpack.c.l.b16 %v462
        %v559 = vunpack.c.l.b16 %v463
        %v560 = vpack.c.b16 %v549, %v548
        %v561 = vpack.c.b16 %v551, %v550
        %v562 = vpack.c.b16 %v553, %v552
        %v563 = vpack.c.b16 %v555, %v554
        %v564 = vpack.c.b16 %v557, %v556
        %v565 = vpack.c.b16 %v559, %v558
        %vm566 = vcmask 31744
        %v568 = vsel %vm566, %v560, 0
        %v571 = vsel %vm566, %v561, 0
        %v574 = vsel %vm566, %v562, 0
        %v577 = vsel %vm566, %v563, 0
        %v580 = vsel %vm566, %v564, 0
        %v583 = vsel %vm566, %v565, 0
        %vm585 = vcmask 1041408
        %v587 = vsel %vm585, %v449, 0
        %589 = vmatprep.subr.bf16.mxu0 0
        %590 = vmatpush1.bf16.msra.mxu0 %v587
        %591 = vmatprep.subr.bf16.mxu0 0
        %592 = vmatpush1.bf16.msra.mxu0 0
        %593 = vmatprep.subr.bf16.mxu0 0
        %594 = vmatpush1.bf16.msra.mxu0 0
        %595 = vmatprep.subr.bf16.mxu0 0
        %596 = vmatpush1.bf16.msra.mxu0 0
        %597 = vmatprep.subr.bf16.mxu0 0
        %598 = vmatpush1.bf16.msra.mxu0 0
        %599 = vmatprep.subr.bf16.mxu0 0
        %600 = vmatpush1.bf16.msra.mxu0 0
        %601 = vmatprep.subr.bf16.mxu0 0
        %602 = vmatpush1.bf16.msra.mxu0 0
        %603 = vmatprep.subr.bf16.mxu0 0
        %604 = vmatpush1.bf16.msra.mxu0 0
        %605 = vmatprep.subr.bf16.mxu0 0
        %606 = vmatpush1.bf16.msra.mxu0 0
        %607 = vmatprep.subr.bf16.mxu0 0
        %608 = vmatpush1.bf16.msra.mxu0 0
        %609 = vmatprep.subr.bf16.mxu0 0
        %610 = vmatpush1.bf16.msra.mxu0 0
        %611 = vmatprep.subr.bf16.mxu0 0
        %612 = vmatpush1.bf16.msra.mxu0 0
        %613 = vmatprep.subr.bf16.mxu0 0
        %614 = vmatpush1.bf16.msra.mxu0 0
        %615 = vmatprep.subr.bf16.mxu0 0
        %616 = vmatpush1.bf16.msra.mxu0 0
        %617 = vmatprep.subr.bf16.mxu0 0
        %618 = vmatpush1.bf16.msra.mxu0 0
        %619 = vmatprep.subr.bf16.mxu0 0
        %620 = vmatpush1.bf16.msra.mxu0 0
        %621 = vmatprep.mubr.bf16.mxu0 0
        %622 = vmatmul.mubr.bf16.gmra.mrb[0].mxu0 %v568
        %v623 = vpop.f32.mrb[0].mxu0
        %v624 = vadd.f32 %v479, %v623
        %v625 = vpop.f32.mrb[0].mxu0
        %v626 = vpop.f32.mrb[0].mxu0
        %v627 = vadd.f32 %v484, %v626
        %v628 = vpop.f32.mrb[0].mxu0
        %629 = vmatprep.mubr.bf16.mxu0 0
        %630 = vmatmul.mubr.bf16.gmra.mrb[0].mxu0 %v571
        %v631 = vpop.f32.mrb[0].mxu0
        %v632 = vadd.f32 %v489, %v631
        %v633 = vpop.f32.mrb[0].mxu0
        %v634 = vpop.f32.mrb[0].mxu0
        %v635 = vadd.f32 %v494, %v634
        %v636 = vpop.f32.mrb[0].mxu0
        %637 = vmatprep.mubr.bf16.mxu0 0
        %638 = vmatmul.mubr.bf16.gmra.mrb[0].mxu0 %v574
        %v639 = vpop.f32.mrb[0].mxu0
        %v640 = vadd.f32 %v499, %v639
        %v641 = vpop.f32.mrb[0].mxu0
        %v642 = vpop.f32.mrb[0].mxu0
        %v643 = vadd.f32 %v504, %v642
        %v644 = vpop.f32.mrb[0].mxu0
        %645 = vmatprep.mubr.bf16.mxu0 0
        %646 = vmatmul.mubr.bf16.gmra.mrb[0].mxu0 %v577
        %v647 = vpop.f32.mrb[0].mxu0
        %v648 = vadd.f32 %v509, %v647
        %v649 = vpop.f32.mrb[0].mxu0
        %v650 = vpop.f32.mrb[0].mxu0
        %v651 = vadd.f32 %v514, %v650
        %v652 = vpop.f32.mrb[0].mxu0
        %653 = vmatprep.mubr.bf16.mxu0 0
        %654 = vmatmul.mubr.bf16.gmra.mrb[0].mxu0 %v580
        %v655 = vpop.f32.mrb[0].mxu0
        %v656 = vadd.f32 %v519, %v655
        %v657 = vpop.f32.mrb[0].mxu0
        %v658 = vpop.f32.mrb[0].mxu0
        %v659 = vadd.f32 %v524, %v658
        %v660 = vpop.f32.mrb[0].mxu0
        %661 = vmatprep.mubr.bf16.mxu0 0
        %662 = vmatmul.mubr.bf16.gmra.mrb[0].mxu0 %v583
        %v663 = vpop.f32.mrb[0].mxu0
        %v664 = vadd.f32 %v529, %v663
        %v665 = vpop.f32.mrb[0].mxu0
        %v666 = vpop.f32.mrb[0].mxu0
        %v667 = vadd.f32 %v534, %v666
        %v668 = vpop.f32.mrb[0].mxu0
        %669 = vdwg.mxu0
        %v670 = vld [vmem:[%s3] sm:$0xf]
        %v671 = vld [vmem:[%s3 + $0x4] sm:$0xf]
        %v672 = vld [vmem:[%s3 + $0x8] sm:$0xf]
        %v673 = vld [vmem:[%s3 + $0xc] sm:$0xf]
        %v674 = vld [vmem:[%s3 + $0x10] sm:$0xf]
        %v675 = vld [vmem:[%s3 + $0x14] sm:$0xf]
        %v676 = vld [vmem:[%s3 + $0x18] sm:$0xf]
        %v677 = vld [vmem:[%s3 + $0x1c] sm:$0xf]
        %v678 = vld [vmem:[%s3 + $0x20] sm:$0xf]
        %v679 = vld [vmem:[%s3 + $0x24] sm:$0xf]
        %v680 = vld [vmem:[%s3 + $0x28] sm:$0xf]
        %v681 = vld [vmem:[%s3 + $0x2c] sm:$0xf]
        %v694 = vunpack.c.l.b16 %v670
        %v695 = vunpack.c.l.b16 %v671
        %v696 = vunpack.c.l.b16 %v672
        %v697 = vunpack.c.l.b16 %v673
        %v698 = vunpack.c.l.b16 %v674
        %v699 = vunpack.c.l.b16 %v675
        %v700 = vunpack.c.l.b16 %v676
        %v701 = vunpack.c.l.b16 %v677
        %v702 = vunpack.c.l.b16 %v678
        %v703 = vunpack.c.l.b16 %v679
        %v704 = vunpack.c.l.b16 %v680
        %v705 = vunpack.c.l.b16 %v681
        %v706 = vpack.c.b16 %v695, %v694
        %v707 = vpack.c.b16 %v697, %v696
        %v708 = vpack.c.b16 %v699, %v698
        %v709 = vpack.c.b16 %v701, %v700
        %v710 = vpack.c.b16 %v703, %v702
        %v711 = vpack.c.b16 %v705, %v704
        %vm712 = vcmask 261120
        %v714 = vsel %vm712, %v706, 0
        %v717 = vsel %vm712, %v707, 0
        %v720 = vsel %vm712, %v708, 0
        %v723 = vsel %vm712, %v709, 0
        %v726 = vsel %vm712, %v710, 0
        %v729 = vsel %vm712, %v711, 0
        %731 = vmatprep.subr.bf16.mxu0 0
        %732 = vmatpush1.bf16.msra.mxu0 %v450
        %733 = vmatprep.subr.bf16.mxu0 0
        %734 = vmatpush1.bf16.msra.mxu0 %v451
        %735 = vmatprep.subr.bf16.mxu0 0
        %736 = vmatpush1.bf16.msra.mxu0 0
        %737 = vmatprep.subr.bf16.mxu0 0
        %738 = vmatpush1.bf16.msra.mxu0 0
        %739 = vmatprep.subr.bf16.mxu0 0
        %740 = vmatpush1.bf16.msra.mxu0 0
        %741 = vmatprep.subr.bf16.mxu0 0
        %742 = vmatpush1.bf16.msra.mxu0 0
        %743 = vmatprep.subr.bf16.mxu0 0
        %744 = vmatpush1.bf16.msra.mxu0 0
        %745 = vmatprep.subr.bf16.mxu0 0
        %746 = vmatpush1.bf16.msra.mxu0 0
        %747 = vmatprep.subr.bf16.mxu0 0
        %748 = vmatpush1.bf16.msra.mxu0 0
        %749 = vmatprep.subr.bf16.mxu0 0
        %750 = vmatpush1.bf16.msra.mxu0 0
        %751 = vmatprep.subr.bf16.mxu0 0
        %752 = vmatpush1.bf16.msra.mxu0 0
        %753 = vmatprep.subr.bf16.mxu0 0
        %754 = vmatpush1.bf16.msra.mxu0 0
        %755 = vmatprep.subr.bf16.mxu0 0
        %756 = vmatpush1.bf16.msra.mxu0 0
        %757 = vmatprep.subr.bf16.mxu0 0
        %758 = vmatpush1.bf16.msra.mxu0 0
        %759 = vmatprep.subr.bf16.mxu0 0
        %760 = vmatpush1.bf16.msra.mxu0 0
        %761 = vmatprep.subr.bf16.mxu0 0
        %762 = vmatpush1.bf16.msra.mxu0 0
        %763 = vmatprep.mubr.bf16.mxu0 0
        %764 = vmatmul.mubr.bf16.gmra.mrb[0].mxu0 %v714
        %v765 = vpop.f32.mrb[0].mxu0
        %v766 = vadd.f32 0.0, %v765
        %v767 = vpop.f32.mrb[0].mxu0
        %v768 = vpop.f32.mrb[0].mxu0
        %v769 = vadd.f32 0.0, %v768
        %v770 = vpop.f32.mrb[0].mxu0
        %771 = vmatprep.mubr.bf16.mxu0 0
        %772 = vmatmul.mubr.bf16.gmra.mrb[0].mxu0 %v717
        %v773 = vpop.f32.mrb[0].mxu0
        %v774 = vadd.f32 0.0, %v773
        %v775 = vpop.f32.mrb[0].mxu0
        %v776 = vpop.f32.mrb[0].mxu0
        %v777 = vadd.f32 0.0, %v776
        %v778 = vpop.f32.mrb[0].mxu0
        %779 = vmatprep.mubr.bf16.mxu0 0
        %780 = vmatmul.mubr.bf16.gmra.mrb[0].mxu0 %v720
        %v781 = vpop.f32.mrb[0].mxu0
        %v782 = vadd.f32 0.0, %v781
        %v783 = vpop.f32.mrb[0].mxu0
        %v784 = vpop.f32.mrb[0].mxu0
        %v785 = vadd.f32 0.0, %v784
        %v786 = vpop.f32.mrb[0].mxu0
        %787 = vmatprep.mubr.bf16.mxu0 0
        %788 = vmatmul.mubr.bf16.gmra.mrb[0].mxu0 %v723
        %v789 = vpop.f32.mrb[0].mxu0
        %v790 = vadd.f32 0.0, %v789
        %v791 = vpop.f32.mrb[0].mxu0
        %v792 = vpop.f32.mrb[0].mxu0
        %v793 = vadd.f32 0.0, %v792
        %v794 = vpop.f32.mrb[0].mxu0
        %795 = vmatprep.mubr.bf16.mxu0 0
        %796 = vmatmul.mubr.bf16.gmra.mrb[0].mxu0 %v726
        %v797 = vpop.f32.mrb[0].mxu0
        %v798 = vadd.f32 0.0, %v797
        %v799 = vpop.f32.mrb[0].mxu0
        %v800 = vpop.f32.mrb[0].mxu0
        %v801 = vadd.f32 0.0, %v800
        %v802 = vpop.f32.mrb[0].mxu0
        %803 = vmatprep.mubr.bf16.mxu0 0
        %804 = vmatmul.mubr.bf16.gmra.mrb[0].mxu0 %v729
        %v805 = vpop.f32.mrb[0].mxu0
        %v806 = vadd.f32 0.0, %v805
        %v807 = vpop.f32.mrb[0].mxu0
        %v808 = vpop.f32.mrb[0].mxu0
        %v809 = vadd.f32 0.0, %v808
        %v810 = vpop.f32.mrb[0].mxu0
        %811 = vdwg.mxu0
        %v812 = vadd.f32 %v624, %v766
        %v813 = vadd.f32 %v627, %v769
        %v814 = vadd.f32 %v632, %v774
        %v815 = vadd.f32 %v635, %v777
        %v816 = vadd.f32 %v640, %v782
        %v817 = vadd.f32 %v643, %v785
        %v818 = vadd.f32 %v648, %v790
        %v819 = vadd.f32 %v651, %v793
        %v820 = vxor.u32 %v812, 2147483648
        %v821 = vxor.u32 %v813, 2147483648
        %v822 = vxor.u32 %v814, 2147483648
        %v823 = vxor.u32 %v815, 2147483648
        %v824 = vxor.u32 %v816, 2147483648
        %v825 = vxor.u32 %v817, 2147483648
        %v826 = vxor.u32 %v818, 2147483648
        %v827 = vxor.u32 %v819, 2147483648
        %v828 = vmul.f32 %v820, 1.442695
        %v829 = vpow.pop %v828
        %v830 = vmul.f32 %v821, 1.442695
        %v831 = vpow.pop %v830
        %v832 = vmul.f32 %v822, 1.442695
        %v833 = vpow.pop %v832
        %v834 = vmul.f32 %v823, 1.442695
        %v835 = vpow.pop %v834
        %v836 = vmul.f32 %v824, 1.442695
        %v837 = vpow.pop %v836
        %v838 = vmul.f32 %v825, 1.442695
        %v839 = vpow.pop %v838
        %v840 = vmul.f32 %v826, 1.442695
        %v841 = vpow.pop %v840
        %v842 = vmul.f32 %v827, 1.442695
        %v843 = vpow.pop %v842
        %v844 = vadd.f32 %v829, 1.0
        %v845 = vadd.f32 %v831, 1.0
        %v846 = vadd.f32 %v833, 1.0
        %v847 = vadd.f32 %v835, 1.0
        %v848 = vadd.f32 %v837, 1.0
        %v849 = vadd.f32 %v839, 1.0
        %v850 = vadd.f32 %v841, 1.0
        %v851 = vadd.f32 %v843, 1.0
        %v852 = vrcp.pop %v844
        %v853 = vmul.f32 1.0, %v852
        %v854 = vrcp.pop %v845
        %v855 = vmul.f32 1.0, %v854
        %v856 = vrcp.pop %v846
        %v857 = vmul.f32 1.0, %v856
        %v858 = vrcp.pop %v847
        %v859 = vmul.f32 1.0, %v858
        %v860 = vrcp.pop %v848
        %v861 = vmul.f32 1.0, %v860
        %v862 = vrcp.pop %v849
        %v863 = vmul.f32 1.0, %v862
        %v864 = vrcp.pop %v850
        %v865 = vmul.f32 1.0, %v864
        %v866 = vrcp.pop %v851
        %v867 = vmul.f32 1.0, %v866
        %v868 = vld [vmem:[%s5] sm:$0xff]
        %v869 = vld [vmem:[%s5 + $0x8] sm:$0xff]
        %v870 = vld [vmem:[%s5 + $0x10] sm:$0xff]
        %v871 = vld [vmem:[%s5 + $0x18] sm:$0xff]
        %873 = vset.pattern.permute.xlu0 0
        %874 = vperm.xlu0 %873, %v868
        %v875 = vpop.permute.xlu0 %874
        %878 = vset.pattern.permute.xlu0 0
        %879 = vperm.xlu0 %878, %v869
        %v880 = vpop.permute.xlu0 %879
        %883 = vset.pattern.permute.xlu0 0
        %884 = vperm.xlu0 %883, %v870
        %v885 = vpop.permute.xlu0 %884
        %888 = vset.pattern.permute.xlu0 0
        %889 = vperm.xlu0 %888, %v871
        %v890 = vpop.permute.xlu0 %889
        %v892 = vadd.f32 %v798, %v875
        %v893 = vadd.f32 %v801, %v880
        %v894 = vadd.f32 %v806, %v885
        %v895 = vadd.f32 %v809, %v890
        %v896 = vmul.f32 %v853, %v892
        %v897 = vmul.f32 %v855, %v893
        %v898 = vmul.f32 %v857, %v894
        %v899 = vmul.f32 %v859, %v895
        %v900 = vadd.f32 %v656, %v896
        %v901 = vadd.f32 %v659, %v897
        %v902 = vadd.f32 %v664, %v898
        %v903 = vadd.f32 %v667, %v899
        %v904 = vtanh.pop %v900
        %v905 = vtanh.pop %v901
        %v906 = vtanh.pop %v902
        %v907 = vtanh.pop %v903
        %v908 = vsub.f32 1.0, %v861
        %v909 = vsub.f32 1.0, %v863
        %v910 = vsub.f32 1.0, %v865
        %v911 = vsub.f32 1.0, %v867
        %v912 = vmul.f32 %v908, %v904
        %v913 = vmul.f32 %v909, %v905
        %v914 = vmul.f32 %v910, %v906
        %v915 = vmul.f32 %v911, %v907
        %v916 = vmul.f32 %v861, %v444
        %v917 = vmul.f32 %v863, %v445
        %v918 = vmul.f32 %v865, %v446
        %v919 = vmul.f32 %v867, %v447
        %v920 = vadd.f32 %v912, %v916
        %v921 = vadd.f32 %v913, %v917
        %v922 = vadd.f32 %v914, %v918
        %v923 = vadd.f32 %v915, %v919
        %924 = vst [vmem:[%s426] sm:$0xff] %v920
        %925 = vst [vmem:[%s426 + $0x8] sm:$0xff] %v921
        %926 = vst [vmem:[%s426 + $0x10] sm:$0xff] %v922
        %927 = vst [vmem:[%s426 + $0x18] sm:$0xff] %v923
        %v928 = vld [vmem:[%s6] sm:$0xf]
        %v929 = vpack.c.bf16 %v921, %v920
        %v930 = vpack.c.bf16 %v923, %v922
        %v932 = vsel %vm712, %v928, 0
        %934 = vmatprep.subr.bf16.mxu0 0
        %935 = vmatpush1.bf16.msra.mxu0 %v929
        %936 = vmatprep.subr.bf16.mxu0 0
        %937 = vmatpush1.bf16.msra.mxu0 %v930
        %938 = vmatprep.subr.bf16.mxu0 0
        %939 = vmatpush1.bf16.msra.mxu0 0
        %940 = vmatprep.subr.bf16.mxu0 0
        %941 = vmatpush1.bf16.msra.mxu0 0
        %942 = vmatprep.subr.bf16.mxu0 0
        %943 = vmatpush1.bf16.msra.mxu0 0
        %944 = vmatprep.subr.bf16.mxu0 0
        %945 = vmatpush1.bf16.msra.mxu0 0
        %946 = vmatprep.subr.bf16.mxu0 0
        %947 = vmatpush1.bf16.msra.mxu0 0
        %948 = vmatprep.subr.bf16.mxu0 0
        %949 = vmatpush1.bf16.msra.mxu0 0
        %950 = vmatprep.subr.bf16.mxu0 0
        %951 = vmatpush1.bf16.msra.mxu0 0
        %952 = vmatprep.subr.bf16.mxu0 0
        %953 = vmatpush1.bf16.msra.mxu0 0
        %954 = vmatprep.subr.bf16.mxu0 0
        %955 = vmatpush1.bf16.msra.mxu0 0
        %956 = vmatprep.subr.bf16.mxu0 0
        %957 = vmatpush1.bf16.msra.mxu0 0
        %958 = vmatprep.subr.bf16.mxu0 0
        %959 = vmatpush1.bf16.msra.mxu0 0
        %960 = vmatprep.subr.bf16.mxu0 0
        %961 = vmatpush1.bf16.msra.mxu0 0
        %962 = vmatprep.subr.bf16.mxu0 0
        %963 = vmatpush1.bf16.msra.mxu0 0
        %964 = vmatprep.subr.bf16.mxu0 0
        %965 = vmatpush1.bf16.msra.mxu0 0
        %966 = vmatprep.mubr.bf16.mxu0 0
        %967 = vmatmul.mubr.bf16.gmra.mrb[0].mxu0 %v932
        %v968 = vpop.f32.mrb[0].mxu0
        %v969 = vadd.f32 0.0, %v968
        %v970 = vpop.f32.mrb[0].mxu0
        %v971 = vpop.f32.mrb[0].mxu0
        %v972 = vpop.f32.mrb[0].mxu0
        %973 = vdwg.mxu0
        %v974 = vld [vmem:[%s7] sm:$0x3]
        %976 = vset.pattern.permute.xlu0 0
        %977 = vperm.xlu0 %976, %v974
        %v978 = vpop.permute.xlu0 %977
        %v980 = vadd.f32 %v969, %v978
        %981 = vst [vmem:[%s442] sm:$0x3] %v980
        %p982 = scmp.lt.s32.totalorder %s25, 1
        %s983 = scalar_select %p982, %s25, 1
        %p984 = scmp.lt.s32.totalorder %s26, 1
        %s985 = scalar_select %p984, %s26, 1
        %s986 = smul.addr %s983, 2
        %s987 = sadd.s32 %s985, %s986
        %s988 = smul.addr %s987, 2
        %s989 = scalar_lea.vmem %s8, %s988
        %s990 = sand.u32 %s253, 1
        %s991 = sand.u32 %s253, 1
        %s992 = smul.addr %s991, 32
        %s993 = scalar_lea.vmem [#allocation3], %s992
        // Predicated region
        $region91: #{gru_step.1} parent=85 // pred_check
          %p994 = pneg %p235
        $region92: #{gru_step.1} parent=85 // pred_check_branch
          %996 = sbr.rel (%p994) target = $region94
        $region93: #{gru_step.1} parent=85 // pred_region
          _
        $region94: #{gru_step.1} parent=85 // pred_fallthru
          _
        // Predicated region
        $region95: #{gru_step.1} parent=85 // pred_check
          %p997 = pneg %p263
        $region96: #{gru_step.1} parent=85 // pred_check_branch
          %999 = sbr.rel (%p997) target = $region98
        $region97: #{gru_step.1} parent=85 // pred_region
          %s1000 = smul.addr %s25, 8
          %s1001 = sadd.s32 %s26, %s1000
          %s1002 = smul.addr %s1001, 8
          %s1003 = scalar_lea.vmem %s9, %s1002
          // Predicated region
          $region99: #{gru_step.1} parent=97 // pred_check
            _
          $region100: #{gru_step.1} parent=97 // pred_check_branch
            %1005 = sbr.rel (0) target = $region102
          $region101: #{gru_step.1} parent=97 // pred_region
            // Predicated region
            $region103: #{gru_step.1} parent=101 // pred_check
              _
            $region104: #{gru_step.1} parent=101 // pred_check_branch
              %1007 = sbr.rel (0) target = $region106
            $region105: #{gru_step.1} parent=101 // pred_region
              // Predicated region
              $region118: #{gru_step.1} parent=105 // pred_check
                _
              $region119: #{gru_step.1} parent=105 // pred_check_branch
                %1028 = sbr.rel (0) target = $region121
              $region120: #{gru_step.1} parent=105 // pred_region
                loop: start=0, step=1, limit=1
                $region122: #{gru_step.1} parent=120 // loop_pre_header
                  _
                $region123: #{gru_step.1} parent=120 // loop_header
                  %s1030 = sphi 0, %s1034
                  %p1031 = scmp.ge.s32.totalorder %s1030, 1
                  %s1035 = sphi %s993, %s993
                  %s1036 = sphi %s1003, %s1003
                $region124: #{gru_step.1} parent=120 // loop_header_branch
                  %1033 = sbr.rel (%p1031) target = $region128
                $region125: #{gru_step.1} parent=120 // loop_body
                  %v1037 = vld [vmem:[%s1035] sm:$0xff]
                  %1038 = vst [vmem:[%s1036] sm:$0xff] %v1037
                  %v1039 = vld [vmem:[%s1035 + $0x8] sm:$0xff]
                  %1040 = vst [vmem:[%s1036 + $0x10] sm:$0xff] %v1039
                  %v1041 = vld [vmem:[%s1035 + $0x10] sm:$0xff]
                  %1042 = vst [vmem:[%s1036 + $0x20] sm:$0xff] %v1041
                  %v1043 = vld [vmem:[%s1035 + $0x18] sm:$0xff]
                  %1044 = vst [vmem:[%s1036 + $0x30] sm:$0xff] %v1043
                $region126: #{gru_step.1} parent=120 // loop_footer
                  %s1034 = sadd.s32 1, %s1030
                $region127: #{gru_step.1} parent=120 // loop_footer_branch
                  %1029 = sbr.rel target = $region123
                $region128: #{gru_step.1} parent=120 // loop_exit
                  _
              $region121: #{gru_step.1} parent=105 // pred_fallthru
                _
              // Predicated region
              $region129: #{gru_step.1} parent=105 // pred_check
                _
              $region130: #{gru_step.1} parent=105 // pred_check_branch
                %1046 = sbr.rel target = $region132
              $region131: #{gru_step.1} parent=105 // pred_region
                _
              $region132: #{gru_step.1} parent=105 // pred_fallthru
                _
            $region106: #{gru_step.1} parent=101 // pred_fallthru
              _
            // Predicated region
            $region107: #{gru_step.1} parent=101 // pred_check
              _
            $region108: #{gru_step.1} parent=101 // pred_check_branch
              %1009 = sbr.rel target = $region110
            $region109: #{gru_step.1} parent=101 // pred_region
              loop: start=0, step=1, limit=1
              $region111: #{gru_step.1} parent=109 // loop_pre_header
                _
              $region112: #{gru_step.1} parent=109 // loop_header
                %s1012 = sphi 0, %s1016
                %p1013 = scmp.ge.s32.totalorder %s1012, 1
                %s1017 = sphi %s993, %s993
                %s1018 = sphi %s1003, %s1003
              $region113: #{gru_step.1} parent=109 // loop_header_branch
                %1015 = sbr.rel (%p1013) target = $region117
              $region114: #{gru_step.1} parent=109 // loop_body
                %v1019 = vld [vmem:[%s1017] sm:$0xff]
                %1020 = vst [vmem:[%s1018] sm:$0xff] %v1019
                %v1021 = vld [vmem:[%s1017 + $0x8] sm:$0xff]
                %1022 = vst [vmem:[%s1018 + $0x10] sm:$0xff] %v1021
                %v1023 = vld [vmem:[%s1017 + $0x10] sm:$0xff]
                %1024 = vst [vmem:[%s1018 + $0x20] sm:$0xff] %v1023
                %v1025 = vld [vmem:[%s1017 + $0x18] sm:$0xff]
                %1026 = vst [vmem:[%s1018 + $0x30] sm:$0xff] %v1025
              $region115: #{gru_step.1} parent=109 // loop_footer
                %s1016 = sadd.s32 1, %s1012
              $region116: #{gru_step.1} parent=109 // loop_footer_branch
                %1011 = sbr.rel target = $region112
              $region117: #{gru_step.1} parent=109 // loop_exit
                _
            $region110: #{gru_step.1} parent=101 // pred_fallthru
              _
          $region102: #{gru_step.1} parent=97 // pred_fallthru
            _
          %1047 = vnop
        $region98: #{gru_step.1} parent=85 // pred_fallthru
          _
      $region86: #{gru_step.1} parent=5 // pred_fallthru
        _
      %p1048 = scmp.le.s32.totalorder 2, %s16
      // Predicated region
      $region133: #{gru_step.1} parent=5 // pred_check
        %p1049 = pneg %p1048
      $region134: #{gru_step.1} parent=5 // pred_check_branch
        %1051 = sbr.rel (%p1049) target = $region136
      $region135: #{gru_step.1} parent=5 // pred_region
        %s1052 = ssub.s32 %s16, 2
        // Predicated region
        $region137: #{gru_step.1} parent=135 // pred_check
          %p1053 = pneg %p241
        $region138: #{gru_step.1} parent=135 // pred_check_branch
          %1055 = sbr.rel (%p1053) target = $region140
        $region139: #{gru_step.1} parent=135 // pred_region
          %p1056 = scmp.lt.s32.totalorder %s27, 1
          %s1057 = scalar_select %p1056, %s27, 1
          %p1058 = scmp.lt.s32.totalorder %s28, 1
          %s1059 = scalar_select %p1058, %s28, 1
          %s1060 = smul.addr %s1057, 2
          %s1061 = sadd.s32 %s1059, %s1060
          %s1062 = smul.addr %s1061, 2
          %s1063 = scalar_lea.vmem %s8, %s1062
        $region140: #{gru_step.1} parent=135 // pred_fallthru
          _
        // Predicated region
        $region141: #{gru_step.1} parent=135 // pred_check
          %p1064 = pneg %p269
        $region142: #{gru_step.1} parent=135 // pred_check_branch
          %1066 = sbr.rel (%p1064) target = $region144
        $region143: #{gru_step.1} parent=135 // pred_region
          %s1067 = sand.u32 %s254, 1
          %s1068 = sand.u32 %s254, 1
          %s1069 = smul.addr %s1068, 32
          %s1070 = scalar_lea.vmem [#allocation3], %s1069
        $region144: #{gru_step.1} parent=135 // pred_fallthru
          _
      $region136: #{gru_step.1} parent=5 // pred_fallthru
        _
    $region6: #{gru_step.1} parent=1 // loop_footer
      %s20 = sadd.s32 1, %s16
    $region7: #{gru_step.1} parent=1 // loop_footer_branch
      %15 = sbr.rel target = $region3
    $region8: #{gru_step.1} parent=1 // loop_exit
      _

</llo_original>
